<compile_context>
chip_gen: v7x
topology: tpu7x:2x2x1
jax: 0.10.0
libtpu: 0.0.40
codegen_flags: <defaults>
</compile_context>

<pallas_src>
import functools

import numpy as np
import jax
import jax.numpy as jnp
from jax.experimental import pallas as pl
from jax.experimental.pallas import tpu as pltpu

STATE_SIZE = 5          # BoundingBox2DIndex.size(): X, Y, HEADING, LENGTH, WIDTH
LABEL_COL = STATE_SIZE  # column 5 of the fused output holds the label logit
OUT_W = 128             # lane-dense fused output width: [states | label | zeros]
MAX_TM = 512            # row tile at large N (mem-bound sweet spot on v6e/v7x)


def _round_up(x, m):
    return (x + m - 1) // m * m


def agent_head_kernel(x_ref, w1_ref, w2_ref, aux_ref, out_ref):
    x = x_ref[...]                                   # (TM, d_model), matmul dtype
    w1 = w1_ref[...]                                 # (d_model, H), matmul dtype
    w2 = w2_ref[...]                                 # (H, OUT_W),   matmul dtype
    aux = aux_ref[...]                               # (4, H) f32
    b1 = aux[0:1, :]                                 # hidden | +label | -label biases
    b2 = aux[1:2, :OUT_W]                            # output biases  [b2 | 0]
    scale = aux[2:3, :OUT_W]                         # [32, 32, pi, 0, ...]
    mask = aux[3:4, :OUT_W]                          # [1, 1, 1, 0, ...]

    # Fused first matmul (MXU): cols [0:d_ffn] hidden pre-act, cols d_ffn and
    # d_ffn+1 carry +/-(x @ wl + bl); remaining cols are zero padding.
    hx = jnp.dot(x, w1, preferred_element_type=jnp.float32) + b1   # (TM, H) f32

    # Plain ReLU over the whole slab: the +/- label columns reconstruct the
    # identity through the second matmul (relu(v) - relu(-v) == v).      (VPU)
    h = jnp.maximum(hx, 0.0)

    # Fused second matmul (MXU): cols 0:5 states pre-act, col 5 label, rest 0.
    s = jnp.dot(h.astype(w2.dtype), w2,
                preferred_element_type=jnp.float32) + b2            # (TM, OUT_W)

    # Post-process with precomputed scale/mask rows: cols 0,1 -> tanh*32,
    # col 2 -> tanh*pi, everything else identity.                 (EUP + VPU)
    out = s + mask * (jnp.tanh(s) * scale - s)
    out_ref[...] = out.astype(out_ref.dtype)


def pack_params(params, *, matmul_dtype=jnp.float32):
    """Fold label head + biases into lane-padded slabs (done once, offline).

    The +/-wl column pair makes a plain ReLU over the full hidden slab exact
    for the label passthrough; pad columns stay zero so they are inert.
    """
    d_model, d_ffn = params["w1"].shape
    H = _round_up(d_ffn + 2, 128)
    jp, jm = d_ffn, d_ffn + 1                        # +label / -label columns
    wl = params["wl"].reshape(d_model)
    bl = params["bl"].reshape(-1)[0]

    w1c = jnp.zeros((d_model, H), jnp.float32)
    w1c = w1c.at[:, :d_ffn].set(params["w1"])
    w1c = w1c.at[:, jp].set(wl)
    w1c = w1c.at[:, jm].set(-wl)

    w2c = jnp.zeros((H, OUT_W), jnp.float32)
    w2c = w2c.at[:d_ffn, :STATE_SIZE].set(params["w2"])
    w2c = w2c.at[jp, LABEL_COL].set(1.0)
    w2c = w2c.at[jm, LABEL_COL].set(-1.0)

    aux = jnp.zeros((4, H), jnp.float32)
    aux = aux.at[0, :d_ffn].set(params["b1"].reshape(-1))
    aux = aux.at[0, jp].set(bl)
    aux = aux.at[0, jm].set(-bl)
    aux = aux.at[1, :STATE_SIZE].set(params["b2"].reshape(-1))
    aux = aux.at[2, 0:2].set(32.0)
    aux = aux.at[2, 2].set(np.pi)
    aux = aux.at[3, 0:3].set(1.0)

    # Weights pre-cast once to the matmul dtype (bf16 halves weight DMA /
    # VMEM residency in production); biases/scales stay f32 for the f32 adds.
    return {"w1c": w1c.astype(matmul_dtype),
            "w2c": w2c.astype(matmul_dtype),
            "aux": aux}


def _row_tiling(N):
    """Pick (TM, N_pad): >=2 grid steps when possible (v7x 2-TC), 512-row
    tiles and an even step count at large N."""
    N_pad = _round_up(max(N, 1), 8)
    if N_pad <= 2 * MAX_TM:
        TM = max(8, _round_up(pl.cdiv(N_pad, 2), 8))
        N_pad = _round_up(N_pad, TM)
    else:
        TM = MAX_TM
        N_pad = _round_up(N_pad, 2 * TM)             # even grid count
    return TM, N_pad


def _vmem_limit_bytes(TM, d_model, H, w_itemsize, out_itemsize):
    # Upper bound: everything double-buffered.
    est = 2 * (TM * d_model * w_itemsize            # x tile
               + TM * OUT_W * out_itemsize          # out tile
               + d_model * H * w_itemsize           # w1c (resident)
               + H * OUT_W * w_itemsize             # w2c (resident)
               + 4 * H * 4)                         # aux (resident)
    if est <= 12 * 1024 * 1024:
        return None                                 # defaults are plenty
    return min(max(est * 3 // 2, 32 * 1024 * 1024), 64 * 1024 * 1024)


@functools.partial(jax.jit, static_argnames=("out_dtype",))
def agent_head_forward(agent_queries, packed, *, out_dtype=jnp.float32):
    """agent_queries: (B, A, d_model). Returns dict of agent_states / agent_labels."""
    w1c, w2c, aux = packed["w1c"], packed["w2c"], packed["aux"]
    B, A, d_model = agent_queries.shape
    H = w1c.shape[1]
    N = B * A
    TM, N_pad = _row_tiling(N)

    # Cast to the matmul dtype here (fuses with reshape/pad under this jit;
    # bf16 activations halve the dominant x read at production N).
    x = agent_queries.reshape(N, d_model).astype(w1c.dtype)
    if N_pad != N:
        x = jnp.pad(x, ((0, N_pad - N), (0, 0)))

    out = pl.pallas_call(
        agent_head_kernel,
        out_shape=jax.ShapeDtypeStruct((N_pad, OUT_W), out_dtype),
        grid=(N_pad // TM,),
        in_specs=[
            pl.BlockSpec((TM, d_model), lambda i: (i, 0)),   # activations
            pl.BlockSpec((d_model, H), lambda i: (0, 0)),    # fused W1|+wl|-wl (resident)
            pl.BlockSpec((H, OUT_W), lambda i: (0, 0)),      # fused W2|label id (resident)
            pl.BlockSpec((4, H), lambda i: (0, 0)),          # b1|b2|scale|mask (resident)
        ],
        out_specs=pl.BlockSpec((TM, OUT_W), lambda i: (i, 0)),
        compiler_params=pltpu.CompilerParams(
            dimension_semantics=("parallel",),
            vmem_limit_bytes=_vmem_limit_bytes(
                TM, d_model, H, w1c.dtype.itemsize,
                jnp.dtype(out_dtype).itemsize)),
    )(x, w1c, w2c, aux)

    # Slices stay inside this jit so they fuse with the kernel's consumer.
    states = out[:N, :STATE_SIZE].astype(jnp.float32).reshape(B, A, STATE_SIZE)
    labels = out[:N, LABEL_COL].astype(jnp.float32).reshape(B, A)
    return {"agent_states": states, "agent_labels": labels}


def init_params(key, d_model, d_ffn):
    """Deterministic synthetic parameters (shapes match AgentHead.__init__)."""
    k1, k2, k3, k4, k5, k6 = jax.random.split(key, 6)
    scale = lambda fan_in: 1.0 / np.sqrt(fan_in)
    return {
        # Linear(d_model, d_ffn): weight stored as (in, out) for x @ W
        "w1": jax.random.uniform(k1, (d_model, d_ffn), jnp.float32,
                                 -scale(d_model), scale(d_model)),
        "b1": jax.random.uniform(k2, (1, d_ffn), jnp.float32,
                                 -scale(d_model), scale(d_model)),
        # Linear(d_ffn, BoundingBox2DIndex.size()=5)
        "w2": jax.random.uniform(k3, (d_ffn, STATE_SIZE), jnp.float32,
                                 -scale(d_ffn), scale(d_ffn)),
        "b2": jax.random.uniform(k4, (1, STATE_SIZE), jnp.float32,
                                 -scale(d_ffn), scale(d_ffn)),
        # Linear(d_model, 1)
        "wl": jax.random.uniform(k5, (d_model, 1), jnp.float32,
                                 -scale(d_model), scale(d_model)),
        "bl": jax.random.uniform(k6, (1, 1), jnp.float32,
                                 -scale(d_model), scale(d_model)),
    }


def reference_forward(agent_queries, params):
    """Pure-JAX reference for correctness checking."""
    x = agent_queries.astype(jnp.float32)
    h = jnp.maximum(x @ params["w1"] + params["b1"][0], 0.0)
    s = h @ params["w2"] + params["b2"][0]
    point = jnp.tanh(s[..., 0:2]) * 32.0
    heading = jnp.tanh(s[..., 2:3]) * np.pi
    s = jnp.concatenate([point, heading, s[..., 3:]], axis=-1)
    labels = (x @ params["wl"] + params["bl"][0])[..., 0]
    return {"agent_states": s, "agent_labels": labels}


if __name__ == "__main__":
    # Small shapes consistent with the module: batch=2, num_agents=8,
    # d_model=32, d_ffn=64.
    B, A, d_model, d_ffn = 2, 8, 32, 64

    key = jax.random.PRNGKey(0)
    k_q, k_p = jax.random.split(key)
    agent_queries = jax.random.normal(k_q, (B, A, d_model), jnp.float32)
    params = init_params(k_p, d_model, d_ffn)

    # matmul_dtype=jnp.bfloat16 (plus out_dtype=jnp.bfloat16) is the
    # v5e/v6e/v7x production option; f32 here so the tight tolerance check
    # against the reference holds exactly.
    packed = pack_params(params, matmul_dtype=jnp.float32)

    out = agent_head_forward(agent_queries, packed, out_dtype=jnp.float32)
    jax.block_until_ready(out)

    ref = reference_forward(agent_queries, params)
    np.testing.assert_allclose(np.asarray(out["agent_states"]),
                               np.asarray(ref["agent_states"]),
                               rtol=1e-5, atol=1e-5)
    np.testing.assert_allclose(np.asarray(out["agent_labels"]),
                               np.asarray(ref["agent_labels"]),
                               rtol=1e-5, atol=1e-5)

    print("KERNEL_OK")
</pallas_src>

<mosaic_0001>
module attributes {stable_mosaic.version = 11 : i64} {
  func.func @agent_head_kernel(%arg0: i32, %arg1: memref<8x32xf32, #tpu.memory_space<vmem>>, %arg2: memref<32x128xf32, #tpu.memory_space<vmem>>, %arg3: memref<128x128xf32, #tpu.memory_space<vmem>>, %arg4: memref<4x128xf32, #tpu.memory_space<vmem>>, %arg5: memref<8x128xf32, #tpu.memory_space<vmem>>) attributes {dimension_semantics = [#tpu.dimension_semantics<parallel>], iteration_bounds = array<i64: 2>, scalar_prefetch = 0 : i64, scratch_operands = 0 : i64, tpu.core_type = #tpu.core_type<tc>, window_params = [{transform_indices = @transform_0, window_bounds = array<i64: 8, 32>}, {pipeline_mode = #tpu.pipeline_mode<synchronous>, transform_indices = @transform_1, window_bounds = array<i64: 32, 128>}, {pipeline_mode = #tpu.pipeline_mode<synchronous>, transform_indices = @transform_2, window_bounds = array<i64: 128, 128>}, {pipeline_mode = #tpu.pipeline_mode<synchronous>, transform_indices = @transform_3, window_bounds = array<i64: 4, 128>}, {transform_indices = @transform_4, window_bounds = array<i64: 8, 128>}]} {
    %c0 = arith.constant 0 : index
    %c0_0 = arith.constant 0 : index
    %0 = vector.load %arg1[%c0, %c0_0] : memref<8x32xf32, #tpu.memory_space<vmem>>, vector<8x32xf32>
    %c0_1 = arith.constant 0 : index
    %c0_2 = arith.constant 0 : index
    %1 = vector.load %arg2[%c0_1, %c0_2] : memref<32x128xf32, #tpu.memory_space<vmem>>, vector<32x128xf32>
    %c0_3 = arith.constant 0 : index
    %c0_4 = arith.constant 0 : index
    %2 = vector.load %arg3[%c0_3, %c0_4] : memref<128x128xf32, #tpu.memory_space<vmem>>, vector<128x128xf32>
    %c0_5 = arith.constant 0 : index
    %c0_6 = arith.constant 0 : index
    %3 = vector.load %arg4[%c0_5, %c0_6] : memref<4x128xf32, #tpu.memory_space<vmem>>, vector<4x128xf32>
    %4 = vector.extract_strided_slice %3 {offsets = [0, 0], sizes = [1, 128], strides = [1, 1]} : vector<4x128xf32> to vector<1x128xf32>
    %5 = vector.extract_strided_slice %3 {offsets = [1, 0], sizes = [1, 128], strides = [1, 1]} : vector<4x128xf32> to vector<1x128xf32>
    %6 = vector.extract_strided_slice %3 {offsets = [2, 0], sizes = [1, 128], strides = [1, 1]} : vector<4x128xf32> to vector<1x128xf32>
    %7 = vector.extract_strided_slice %3 {offsets = [3, 0], sizes = [1, 128], strides = [1, 1]} : vector<4x128xf32> to vector<1x128xf32>
    %cst = arith.constant dense<0.000000e+00> : vector<8x128xf32>
    %8 = tpu.matmul %0, %1, %cst {dimension_numbers = #tpu.dot_dimension_numbers<[1], [0], [0], [1], [0, 0, 1, 1], [], []>} : vector<8x32xf32>, vector<32x128xf32>, vector<8x128xf32> -> vector<8x128xf32>
    %9 = vector.broadcast %4 : vector<1x128xf32> to vector<8x128xf32>
    %10 = arith.addf %8, %9 : vector<8x128xf32>
    %cst_7 = arith.constant 0.000000e+00 : f32
    %11 = vector.broadcast %cst_7 : f32 to vector<8x128xf32>
    %12 = arith.maximumf %10, %11 : vector<8x128xf32>
    %cst_8 = arith.constant dense<0.000000e+00> : vector<8x128xf32>
    %13 = tpu.matmul %12, %2, %cst_8 {dimension_numbers = #tpu.dot_dimension_numbers<[1], [0], [0], [1], [0, 0, 1, 1], [], []>} : vector<8x128xf32>, vector<128x128xf32>, vector<8x128xf32> -> vector<8x128xf32>
    %14 = vector.broadcast %5 : vector<1x128xf32> to vector<8x128xf32>
    %15 = arith.addf %13, %14 : vector<8x128xf32>
    %16 = math.tanh %15 : vector<8x128xf32>
    %17 = vector.broadcast %6 : vector<1x128xf32> to vector<8x128xf32>
    %18 = arith.mulf %16, %17 : vector<8x128xf32>
    %19 = arith.subf %18, %15 : vector<8x128xf32>
    %20 = vector.broadcast %7 : vector<1x128xf32> to vector<8x128xf32>
    %21 = arith.mulf %20, %19 : vector<8x128xf32>
    %22 = arith.addf %15, %21 : vector<8x128xf32>
    %c0_9 = arith.constant 0 : index
    %c0_10 = arith.constant 0 : index
    %23 = vector.load %arg5[%c0_9, %c0_10] : memref<8x128xf32, #tpu.memory_space<vmem>>, vector<8x128xf32>
    tpu.vector_store %arg5[%c0_9, %c0_10], %22 {strides = array<i32>} : memref<8x128xf32, #tpu.memory_space<vmem>>, vector<8x128xf32>,
    return
  }
  func.func @transform_0(%arg0: i32) -> (i32, i32) {
    %c0_i32 = arith.constant 0 : i32
    %c0_i32_0 = arith.constant 0 : i32
    return %arg0, %c0_i32 : i32, i32
  }
  func.func @transform_1(%arg0: i32) -> (i32, i32) {
    %c0_i32 = arith.constant 0 : i32
    %c0_i32_0 = arith.constant 0 : i32
    %c0_i32_1 = arith.constant 0 : i32
    return %c0_i32, %c0_i32_0 : i32, i32
  }
  func.func @transform_2(%arg0: i32) -> (i32, i32) {
    %c0_i32 = arith.constant 0 : i32
    %c0_i32_0 = arith.constant 0 : i32
    %c0_i32_1 = arith.constant 0 : i32
    return %c0_i32, %c0_i32_0 : i32, i32
  }
  func.func @transform_3(%arg0: i32) -> (i32, i32) {
    %c0_i32 = arith.constant 0 : i32
    %c0_i32_0 = arith.constant 0 : i32
    %c0_i32_1 = arith.constant 0 : i32
    return %c0_i32, %c0_i32_0 : i32, i32
  }
  func.func @transform_4(%arg0: i32) -> (i32, i32) {
    %c0_i32 = arith.constant 0 : i32
    %c0_i32_0 = arith.constant 0 : i32
    return %arg0, %c0_i32 : i32, i32
  }
}

</mosaic_0001>

<llo_original>
// kernel: squeeze.1
$region0: #{squeeze.1}
  %s0 = inlined_call_operand.vmem [shape: f32[16], index: 0, kind: input, shape index: {}]
  %s1 = inlined_call_operand.hbm [shape: f32[2,8], index: 1, kind: output, shape index: {}]
  $region1: #{squeeze.1} parent=0
    #allocation0 [shape = 'u8[1024]{0}', space=vmem, size = 0x400, scoped, tag = 'operand span for operand 1']
    #allocation1 [shape = 's32[1]{0}', space=sflag, size = 0x4, scoped, tag = 'scoped memory for squeeze.1']
    #allocation2 [shape = 'u8[4096]{0}', space=vmem, size = 0x1000, scoped, tag = 'scoped mem for output reshape']
    #allocation3 [shape = 'u8[4096]{0}', space=vmem, size = 0x1000, scoped, tag = 'scoped mem for input reshape']
    %2 = vsyncpa [#allocation1], 0
    %s4 = sshllo.u32 0, 1
    %v5 = vld [vmem:[%s0] sm:%s4]
    %6 = vst [vmem:[#allocation3] sm:%s4] %v5
    %v7 = vld [vmem:[#allocation3] sm:$0x1]
    %vm8 = vcmask 64512
    %9 = vst.msk [vmem:[#allocation2] sm:$0x1] %vm8, %v7
    %v10 = vld [vmem:[#allocation3] sm:$0x1]
    %11 = vrot.lane.b32.xlu0 %v10, 120
    %v12 = vpop.permute.xlu0 %11
    %vm13 = vcmask 64512
    %s14 = scalar_lea.vmem [#allocation2], 1
    %15 = vst.msk [vmem:[%s14] sm:$0x1] %vm13, %v12
    %s17 = sshllo.u32 0, 2
    %v19 = vld [vmem:[#allocation2] sm:%s17]
    %s20 = sshllo.u32 0, 2
    %21 = vst [vmem:[#allocation0] sm:%s20] %v19
    %s23 = ssub.s32 32, 32
    %24 = vsyncadd [#allocation1], %s23
    %s26 = sshll.u32 [#allocation0], 4
    %s27 = int_to_ptr.vmem [resolvable:$true] %s26
    %29 = dma.vmem_to_hbm [thread:$0]  %s27, 32, %s1, [#allocation1]
    %30 = dma.done [#allocation1], 32
    %31 = vsyncpa [#allocation1], 1

// kernel: agent_head_forward.1
$region0: #{agent_head_forward.1}
  #allocation0 [shape = 'u32[]', space=smem, size = 0x4, offset = 0x4, fixed_abs, tag = 'smem constant byte address 0x4 - core index']
  #allocation1 [shape = 'u32[144,128]{1,0:T(1,128)}', space=vmem, size = 0x12000, scoped, tag = 'internal scratch']
  %s0 = inlined_call_operand.hbm [shape: f32[16,32], index: 0, kind: input, shape index: {}]
  %s1 = inlined_call_operand.hbm [shape: f32[32,128], index: 1, kind: input, shape index: {}]
  %s2 = inlined_call_operand.hbm [shape: f32[128,128], index: 2, kind: input, shape index: {}]
  %s3 = inlined_call_operand.vmem [shape: f32[4,128], index: 3, kind: input, shape index: {}]
  %s4 = inlined_call_operand.vmem [shape: f32[16,128], index: 4, kind: output, shape index: {}]
  %s5 = sld [smem:[#allocation0]]
  $region61: #{agent_head_forward.1} parent=0
    _
  %s7 = ssub.s32 1, %s5
  %s8 = scalar_select 0, %s7, %s5
  $region1: #{agent_head_forward.1} parent=0
    #allocation2 [shape = 'u8[8192]{0}', space=vmem, size = 0x2000, scoped, tag = 'input window, operand 0']
    #allocation3 [shape = 's32[2]{0}', space=sflag, size = 0x8, scoped, tag = 'scoped memory for agent_head_forward.1']
    #allocation4 [shape = 'u8[16384]{0}', space=vmem, size = 0x4000, scoped, tag = 'input window, operand 1, single buffered']
    #allocation5 [shape = 's32[1]{0}', space=sflag, size = 0x4, scoped, tag = 'scoped memory for agent_head_forward.1']
    #allocation6 [shape = 'u8[65536]{0}', space=vmem, size = 0x10000, scoped, tag = 'input window, operand 2, single buffered']
    %9 = vsyncpa [#allocation3], 0
    %s10 = scalar_lea.sflag [#allocation3], 1
    %11 = vsyncpa %s10, 0
    %12 = vsyncpa [#allocation5], 0
    loop: start=0, step=1, limit=4
    $region2: #{agent_head_forward.1} parent=1 // loop_pre_header
      _
    $region3: #{agent_head_forward.1} parent=1 // loop_header
      %s14 = sphi 0, %s18
      %p15 = scmp.ge.s32.totalorder %s14, 4
      %s24 = sphi 0, %s26
      %s27 = sphi 0, %s24
      %s28 = sphi 0, %s27
      %s44 = sphi 0, %s28
      %s48 = sphi 0, %s48
      %s50 = sphi 0, %s48
      %s51 = sphi 0, %s50
      %s65 = sphi 0, %s51
      %s69 = sphi 0, %s69
      %s71 = sphi 0, %s69
      %s72 = sphi 0, %s71
      %s86 = sphi 0, %s72
      %s90 = sphi 0, %s90
      %s92 = sphi 0, %s90
      %s93 = sphi 0, %s92
      %s107 = sphi 0, %s93
      %s113 = sphi 0, %s115
      %s116 = sphi 0, %s113
      %s117 = sphi 0, %s116
      %s133 = sphi 0, %s117
    $region4: #{agent_head_forward.1} parent=1 // loop_header_branch
      %17 = sbr.rel (%p15) target = $region8
    $region5: #{agent_head_forward.1} parent=1 // loop_body
      %s19 = ssub.s32 %s14, 1
      %s20 = ssub.s32 %s14, 2
      %s21 = sadd.s32 %s14, 1
      %s22 = ssub.s32 %s14, %s21
      %p23 = scmp.eq.s32.totalorder %s22, 0
      %s25 = sadd.s32 %s24, 1
      %s26 = scalar_select %p23, %s24, %s25
      %p29 = pneg %p23
      %p30 = scmp.eq.s32.totalorder %s14, 1
      %p31 = por %p29, %p30
      %p32 = scmp.ne.s32.totalorder %s24, %s27
      %p33 = scmp.eq.s32.totalorder %s14, 0
      %p34 = por %p32, %p33
      %p35 = scmp.ne.s32.totalorder %s24, %s27
      %p36 = scmp.eq.s32.totalorder %s19, 1
      %p37 = por %p35, %p36
      %p38 = scmp.ne.s32.totalorder %s27, %s28
      %p39 = scmp.eq.s32.totalorder %s19, 0
      %p40 = por %p38, %p39
      %p41 = scmp.ne.s32.totalorder %s27, %s28
      %p42 = scmp.eq.s32.totalorder %s20, 1
      %p43 = por %p41, %p42
      %p45 = scmp.ne.s32.totalorder %s28, %s44
      %p46 = scmp.eq.s32.totalorder %s20, 0
      %p47 = por %p45, %p46
      %s49 = sadd.s32 %s48, 1
      %p52 = scmp.eq.s32.totalorder %s14, 1
      %p53 = scmp.ne.s32.totalorder %s48, %s50
      %p54 = scmp.eq.s32.totalorder %s14, 0
      %p55 = por %p53, %p54
      %p56 = scmp.ne.s32.totalorder %s48, %s50
      %p57 = scmp.eq.s32.totalorder %s19, 1
      %p58 = por %p56, %p57
      %p59 = scmp.ne.s32.totalorder %s50, %s51
      %p60 = scmp.eq.s32.totalorder %s19, 0
      %p61 = por %p59, %p60
      %p62 = scmp.ne.s32.totalorder %s50, %s51
      %p63 = scmp.eq.s32.totalorder %s20, 1
      %p64 = por %p62, %p63
      %p66 = scmp.ne.s32.totalorder %s51, %s65
      %p67 = scmp.eq.s32.totalorder %s20, 0
      %p68 = por %p66, %p67
      %s70 = sadd.s32 %s69, 1
      %p73 = scmp.eq.s32.totalorder %s14, 1
      %p74 = scmp.ne.s32.totalorder %s69, %s71
      %p75 = scmp.eq.s32.totalorder %s14, 0
      %p76 = por %p74, %p75
      %p77 = scmp.ne.s32.totalorder %s69, %s71
      %p78 = scmp.eq.s32.totalorder %s19, 1
      %p79 = por %p77, %p78
      %p80 = scmp.ne.s32.totalorder %s71, %s72
      %p81 = scmp.eq.s32.totalorder %s19, 0
      %p82 = por %p80, %p81
      %p83 = scmp.ne.s32.totalorder %s71, %s72
      %p84 = scmp.eq.s32.totalorder %s20, 1
      %p85 = por %p83, %p84
      %p87 = scmp.ne.s32.totalorder %s72, %s86
      %p88 = scmp.eq.s32.totalorder %s20, 0
      %p89 = por %p87, %p88
      %s91 = sadd.s32 %s90, 1
      %p94 = scmp.eq.s32.totalorder %s14, 1
      %p95 = scmp.ne.s32.totalorder %s90, %s92
      %p96 = scmp.eq.s32.totalorder %s14, 0
      %p97 = por %p95, %p96
      %p98 = scmp.ne.s32.totalorder %s90, %s92
      %p99 = scmp.eq.s32.totalorder %s19, 1
      %p100 = por %p98, %p99
      %p101 = scmp.ne.s32.totalorder %s92, %s93
      %p102 = scmp.eq.s32.totalorder %s19, 0
      %p103 = por %p101, %p102
      %p104 = scmp.ne.s32.totalorder %s92, %s93
      %p105 = scmp.eq.s32.totalorder %s20, 1
      %p106 = por %p104, %p105
      %p108 = scmp.ne.s32.totalorder %s93, %s107
      %p109 = scmp.eq.s32.totalorder %s20, 0
      %p110 = por %p108, %p109
      %s111 = ssub.s32 %s14, %s21
      %p112 = scmp.eq.s32.totalorder %s111, 0
      %s114 = sadd.s32 %s113, 1
      %s115 = scalar_select %p112, %s113, %s114
      %p118 = pneg %p112
      %p119 = scmp.eq.s32.totalorder %s14, 1
      %p120 = por %p118, %p119
      %p121 = scmp.ne.s32.totalorder %s113, %s116
      %p122 = scmp.eq.s32.totalorder %s14, 0
      %p123 = por %p121, %p122
      %p124 = scmp.ne.s32.totalorder %s113, %s116
      %p125 = scmp.eq.s32.totalorder %s19, 1
      %p126 = por %p124, %p125
      %p127 = scmp.ne.s32.totalorder %s116, %s117
      %p128 = scmp.eq.s32.totalorder %s19, 0
      %p129 = por %p127, %p128
      %p130 = scmp.ne.s32.totalorder %s116, %s117
      %p131 = scmp.eq.s32.totalorder %s20, 1
      %p132 = por %p130, %p131
      %p134 = scmp.ne.s32.totalorder %s117, %s133
      %p135 = scmp.eq.s32.totalorder %s20, 0
      %p136 = por %p134, %p135
      %p137 = scmp.le.s32.totalorder 1, %s14
      %p138 = scmp.lt.s32.totalorder %s14, 3
      %p139 = pnand %p137, %p138
      %p140 = pneg %p139
      // Predicated region
      $region9: #{agent_head_forward.1} parent=5 // pred_check
        _
      $region10: #{agent_head_forward.1} parent=5 // pred_check_branch
        %142 = sbr.rel (%p139) target = $region12
      $region11: #{agent_head_forward.1} parent=5 // pred_region
        %s143 = ssub.s32 %s14, 1
        // Predicated region
        $region13: #{agent_head_forward.1} parent=11 // pred_check
          %p144 = pneg %p61
        $region14: #{agent_head_forward.1} parent=11 // pred_check_branch
          %146 = sbr.rel (%p144) target = $region16
        $region15: #{agent_head_forward.1} parent=11 // pred_region
          %s148 = ssub.s32 512, 512
          %149 = vsyncadd [#allocation5], %s148
          %s150 = sshll.u32 [#allocation4], 4
          %s151 = int_to_ptr.vmem [resolvable:$true] %s150
          %156 = dma.hbm_to_vmem [thread:$0]  %s1, 512, %s151, [#allocation5], 128, 128, 8
        $region16: #{agent_head_forward.1} parent=11 // pred_fallthru
          _
        // Predicated region
        $region17: #{agent_head_forward.1} parent=11 // pred_check
          %p157 = pneg %p82
        $region18: #{agent_head_forward.1} parent=11 // pred_check_branch
          %159 = sbr.rel (%p157) target = $region20
        $region19: #{agent_head_forward.1} parent=11 // pred_region
          %s161 = ssub.s32 2048, 2048
          %162 = vsyncadd [#allocation5], %s161
          %s163 = sshll.u32 [#allocation6], 4
          %s164 = int_to_ptr.vmem [resolvable:$true] %s163
          %169 = dma.hbm_to_vmem [thread:$0]  %s2, 2048, %s164, [#allocation5], 128, 128, 8
        $region20: #{agent_head_forward.1} parent=11 // pred_fallthru
          _
        // Predicated region
        $region21: #{agent_head_forward.1} parent=11 // pred_check
          %p170 = pneg %p103
        $region22: #{agent_head_forward.1} parent=11 // pred_check_branch
          %172 = sbr.rel (%p170) target = $region24
        $region23: #{agent_head_forward.1} parent=11 // pred_region
          _
        $region24: #{agent_head_forward.1} parent=11 // pred_fallthru
          _
      $region12: #{agent_head_forward.1} parent=5 // pred_fallthru
        _
      %p173 = scmp.lt.s32.totalorder %s14, 2
      // Predicated region
      $region25: #{agent_head_forward.1} parent=5 // pred_check
        %p174 = pneg %p173
      $region26: #{agent_head_forward.1} parent=5 // pred_check_branch
        %176 = sbr.rel (%p174) target = $region28
      $region27: #{agent_head_forward.1} parent=5 // pred_region
        // Predicated region
        $region29: #{agent_head_forward.1} parent=27 // pred_check
          %p177 = pneg %p34
        $region30: #{agent_head_forward.1} parent=27 // pred_check_branch
          %179 = sbr.rel (%p177) target = $region32
        $region31: #{agent_head_forward.1} parent=27 // pred_region
          %s180 = sand.u32 %s24, 1
          %s181 = scalar_lea.sflag [#allocation3], %s180
          %s182 = sand.u32 %s24, 1
          %s183 = smul.addr %s182, 8
          %s184 = scalar_lea.vmem [#allocation2], %s183
          %s186 = ssub.s32 128, 128
          %187 = vsyncadd %s181, %s186
          %s188 = smul.addr %s14, 128
          %s189 = scalar_lea.hbm %s0, %s188
          %s191 = sshll.u32 %s184, 4
          %s192 = int_to_ptr.vmem [resolvable:$true] %s191
          %194 = dma.hbm_to_vmem [thread:$0]  %s189, 128, %s192, %s181
        $region32: #{agent_head_forward.1} parent=27 // pred_fallthru
          _
      $region28: #{agent_head_forward.1} parent=5 // pred_fallthru
        _
      %p195 = scmp.le.s32.totalorder 1, %s14
      %p196 = scmp.lt.s32.totalorder %s14, 3
      %p197 = pnand %p195, %p196
      %p198 = pneg %p197
      // Predicated region
      $region33: #{agent_head_forward.1} parent=5 // pred_check
        _
      $region34: #{agent_head_forward.1} parent=5 // pred_check_branch
        %200 = sbr.rel (%p197) target = $region36
      $region35: #{agent_head_forward.1} parent=5 // pred_region
        %s201 = ssub.s32 %s14, 1
        %s202 = sand.u32 %s27, 1
        %s203 = scalar_lea.sflag [#allocation3], %s202
        %s204 = sand.u32 %s27, 1
        %s205 = smul.addr %s204, 8
        %s206 = scalar_lea.vmem [#allocation2], %s205
        // Predicated region
        $region37: #{agent_head_forward.1} parent=35 // pred_check
          %p207 = pneg %p40
        $region38: #{agent_head_forward.1} parent=35 // pred_check_branch
          %209 = sbr.rel (%p207) target = $region40
        $region39: #{agent_head_forward.1} parent=35 // pred_region
          %210 = dma.done %s203, 128
        $region40: #{agent_head_forward.1} parent=35 // pred_fallthru
          _
        // Predicated region
        $region41: #{agent_head_forward.1} parent=35 // pred_check
          %p211 = pneg %p61
        $region42: #{agent_head_forward.1} parent=35 // pred_check_branch
          %213 = sbr.rel (%p211) target = $region44
        $region43: #{agent_head_forward.1} parent=35 // pred_region
          %214 = dma.done [#allocation5], 512
        $region44: #{agent_head_forward.1} parent=35 // pred_fallthru
          _
        // Predicated region
        $region45: #{agent_head_forward.1} parent=35 // pred_check
          %p215 = pneg %p82
        $region46: #{agent_head_forward.1} parent=35 // pred_check_branch
          %217 = sbr.rel (%p215) target = $region48
        $region47: #{agent_head_forward.1} parent=35 // pred_region
          %218 = dma.done [#allocation5], 2048
        $region48: #{agent_head_forward.1} parent=35 // pred_fallthru
          _
        %s219 = sand.u32 %s27, 1
        %s220 = scalar_lea.sflag [#allocation3], %s219
        %s221 = sand.u32 %s27, 1
        %s222 = smul.addr %s221, 8
        %s223 = scalar_lea.vmem [#allocation2], %s222
        %p224 = pneg %p40
        %p225 = pneg %p37
        %p226 = pneg %p61
        %p227 = pneg %p58
        %p228 = pneg %p82
        %p229 = pneg %p79
        %p230 = pneg %p103
        %p231 = pneg %p100
        %p232 = pneg %p129
        %p233 = pneg %p126
        %p234 = scmp.lt.s32.totalorder %s19, 1
        %s235 = scalar_select %p234, %s19, 1
        %s236 = smul.addr %s235, 8
        %s237 = scalar_lea.vmem %s4, %s236
        %p238 = scmp.lt.s32.totalorder %s19, 1
        %s239 = scalar_select %p238, %s19, 1
        %s240 = smul.addr %s239, 8
        %s241 = scalar_lea.vmem %s4, %s240
        %v242 = vld [vmem:[%s206] sm:$0xff]
        %v243 = vld [vmem:[#allocation4] sm:$0xff]
        %v244 = vld [vmem:[#allocation4 + $0x8] sm:$0xff]
        %v245 = vld [vmem:[#allocation4 + $0x10] sm:$0xff]
        %v246 = vld [vmem:[#allocation4 + $0x18] sm:$0xff]
        %v247 = vld [vmem:[#allocation6] sm:$0xff]
        %v248 = vld [vmem:[#allocation6 + $0x8] sm:$0xff]
        %v249 = vld [vmem:[#allocation6 + $0x10] sm:$0xff]
        %v250 = vld [vmem:[#allocation6 + $0x18] sm:$0xff]
        %v251 = vld [vmem:[#allocation6 + $0x20] sm:$0xff]
        %v252 = vld [vmem:[#allocation6 + $0x28] sm:$0xff]
        %v253 = vld [vmem:[#allocation6 + $0x30] sm:$0xff]
        %v254 = vld [vmem:[#allocation6 + $0x38] sm:$0xff]
        %v255 = vld [vmem:[#allocation6 + $0x40] sm:$0xff]
        %v256 = vld [vmem:[#allocation6 + $0x48] sm:$0xff]
        %v257 = vld [vmem:[#allocation6 + $0x50] sm:$0xff]
        %v258 = vld [vmem:[#allocation6 + $0x58] sm:$0xff]
        %v259 = vld [vmem:[#allocation6 + $0x60] sm:$0xff]
        %v260 = vld [vmem:[#allocation6 + $0x68] sm:$0xff]
        %v261 = vld [vmem:[#allocation6 + $0x70] sm:$0xff]
        %v262 = vld [vmem:[#allocation6 + $0x78] sm:$0xff]
        %v263 = vld [vmem:[%s3] sm:$0xf]
        %v264 = vlaneseq
        %v265 = vshrl.u32 %v264, 7
        %v266 = vsub.s32 0, %v265
        %v267 = vrot.slane %v263, %v266
        %vm268 = vcmask 261120
        %v270 = vsel %vm268, %v242, 0
        %272 = vmatprep.subr.mxu0 0.0
        %273 = vmatpush1.msra.mxu0 %v243
        %274 = vmatprep.subr.mxu0 0.0
        %275 = vmatpush1.msra.mxu0 %v244
        %276 = vmatprep.subr.mxu0 0.0
        %277 = vmatpush1.msra.mxu0 %v245
        %278 = vmatprep.subr.mxu0 0.0
        %279 = vmatpush1.msra.mxu0 %v246
        %280 = vmatprep.subr.mxu0 0.0
        %281 = vmatpush1.msra.mxu0 0.0
        %282 = vmatprep.subr.mxu0 0.0
        %283 = vmatpush1.msra.mxu0 0.0
        %284 = vmatprep.subr.mxu0 0.0
        %285 = vmatpush1.msra.mxu0 0.0
        %286 = vmatprep.subr.mxu0 0.0
        %287 = vmatpush1.msra.mxu0 0.0
        %288 = vmatprep.subr.mxu0 0.0
        %289 = vmatpush1.msra.mxu0 0.0
        %290 = vmatprep.subr.mxu0 0.0
        %291 = vmatpush1.msra.mxu0 0.0
        %292 = vmatprep.subr.mxu0 0.0
        %293 = vmatpush1.msra.mxu0 0.0
        %294 = vmatprep.subr.mxu0 0.0
        %295 = vmatpush1.msra.mxu0 0.0
        %296 = vmatprep.subr.mxu0 0.0
        %297 = vmatpush1.msra.mxu0 0.0
        %298 = vmatprep.subr.mxu0 0.0
        %299 = vmatpush1.msra.mxu0 0.0
        %300 = vmatprep.subr.mxu0 0.0
        %301 = vmatpush1.msra.mxu0 0.0
        %302 = vmatprep.subr.mxu0 0.0
        %303 = vmatpush1.msra.mxu0 0.0
        %304 = vmatprep.subr.mxu0 0.0
        %305 = vmatpush1.msra.mxu0 0.0
        %306 = vmatprep.subr.mxu0 0.0
        %307 = vmatpush1.msra.mxu0 0.0
        %308 = vmatprep.subr.mxu0 0.0
        %309 = vmatpush1.msra.mxu0 0.0
        %310 = vmatprep.subr.mxu0 0.0
        %311 = vmatpush1.msra.mxu0 0.0
        %312 = vmatprep.subr.mxu0 0.0
        %313 = vmatpush1.msra.mxu0 0.0
        %314 = vmatprep.subr.mxu0 0.0
        %315 = vmatpush1.msra.mxu0 0.0
        %316 = vmatprep.subr.mxu0 0.0
        %317 = vmatpush1.msra.mxu0 0.0
        %318 = vmatprep.subr.mxu0 0.0
        %319 = vmatpush1.msra.mxu0 0.0
        %320 = vmatprep.subr.mxu0 0.0
        %321 = vmatpush1.msra.mxu0 0.0
        %322 = vmatprep.subr.mxu0 0.0
        %323 = vmatpush1.msra.mxu0 0.0
        %324 = vmatprep.subr.mxu0 0.0
        %325 = vmatpush1.msra.mxu0 0.0
        %326 = vmatprep.subr.mxu0 0.0
        %327 = vmatpush1.msra.mxu0 0.0
        %328 = vmatprep.subr.mxu0 0.0
        %329 = vmatpush1.msra.mxu0 0.0
        %330 = vmatprep.subr.mxu0 0.0
        %331 = vmatpush1.msra.mxu0 0.0
        %332 = vmatprep.subr.mxu0 0.0
        %333 = vmatpush1.msra.mxu0 0.0
        %334 = vmatprep.subr.mxu0 0.0
        %335 = vmatpush1.msra.mxu0 0.0
        %336 = vmatprep.mubr.f32.mxu0 0.0
        %337 = vmatmul.mubr.f32.gmra.mrb[0].mxu0 %v270
        %v338 = vpop.f32.mrb[0].mxu0
        %v339 = vadd.f32 %v267, %v338
        %v340 = vpop.f32.mrb[0].mxu0
        %341 = vdwg.mxu0
        %v342 = vmax.f32 %v339, 0.0
        %v343 = vlaneseq
        %v344 = vshrl.u32 %v343, 7
        %v345 = vsub.s32 1, %v344
        %v346 = vrot.slane %v263, %v345
        %347 = vmatprep.subr.mxu0 0.0
        %348 = vmatpush1.msra.mxu0 %v247
        %349 = vmatprep.subr.mxu0 0.0
        %350 = vmatpush1.msra.mxu0 %v248
        %351 = vmatprep.subr.mxu0 0.0
        %352 = vmatpush1.msra.mxu0 %v249
        %353 = vmatprep.subr.mxu0 0.0
        %354 = vmatpush1.msra.mxu0 %v250
        %355 = vmatprep.subr.mxu0 0.0
        %356 = vmatpush1.msra.mxu0 %v251
        %357 = vmatprep.subr.mxu0 0.0
        %358 = vmatpush1.msra.mxu0 %v252
        %359 = vmatprep.subr.mxu0 0.0
        %360 = vmatpush1.msra.mxu0 %v253
        %361 = vmatprep.subr.mxu0 0.0
        %362 = vmatpush1.msra.mxu0 %v254
        %363 = vmatprep.subr.mxu0 0.0
        %364 = vmatpush1.msra.mxu0 %v255
        %365 = vmatprep.subr.mxu0 0.0
        %366 = vmatpush1.msra.mxu0 %v256
        %367 = vmatprep.subr.mxu0 0.0
        %368 = vmatpush1.msra.mxu0 %v257
        %369 = vmatprep.subr.mxu0 0.0
        %370 = vmatpush1.msra.mxu0 %v258
        %371 = vmatprep.subr.mxu0 0.0
        %372 = vmatpush1.msra.mxu0 %v259
        %373 = vmatprep.subr.mxu0 0.0
        %374 = vmatpush1.msra.mxu0 %v260
        %375 = vmatprep.subr.mxu0 0.0
        %376 = vmatpush1.msra.mxu0 %v261
        %377 = vmatprep.subr.mxu0 0.0
        %378 = vmatpush1.msra.mxu0 %v262
        %379 = vmatprep.subr.mxu0 0.0
        %380 = vmatpush1.msra.mxu0 0.0
        %381 = vmatprep.subr.mxu0 0.0
        %382 = vmatpush1.msra.mxu0 0.0
        %383 = vmatprep.subr.mxu0 0.0
        %384 = vmatpush1.msra.mxu0 0.0
        %385 = vmatprep.subr.mxu0 0.0
        %386 = vmatpush1.msra.mxu0 0.0
        %387 = vmatprep.subr.mxu0 0.0
        %388 = vmatpush1.msra.mxu0 0.0
        %389 = vmatprep.subr.mxu0 0.0
        %390 = vmatpush1.msra.mxu0 0.0
        %391 = vmatprep.subr.mxu0 0.0
        %392 = vmatpush1.msra.mxu0 0.0
        %393 = vmatprep.subr.mxu0 0.0
        %394 = vmatpush1.msra.mxu0 0.0
        %395 = vmatprep.subr.mxu0 0.0
        %396 = vmatpush1.msra.mxu0 0.0
        %397 = vmatprep.subr.mxu0 0.0
        %398 = vmatpush1.msra.mxu0 0.0
        %399 = vmatprep.subr.mxu0 0.0
        %400 = vmatpush1.msra.mxu0 0.0
        %401 = vmatprep.subr.mxu0 0.0
        %402 = vmatpush1.msra.mxu0 0.0
        %403 = vmatprep.subr.mxu0 0.0
        %404 = vmatpush1.msra.mxu0 0.0
        %405 = vmatprep.subr.mxu0 0.0
        %406 = vmatpush1.msra.mxu0 0.0
        %407 = vmatprep.subr.mxu0 0.0
        %408 = vmatpush1.msra.mxu0 0.0
        %409 = vmatprep.subr.mxu0 0.0
        %410 = vmatpush1.msra.mxu0 0.0
        %411 = vmatprep.mubr.f32.mxu0 0.0
        %412 = vmatmul.mubr.f32.gmra.mrb[0].mxu0 %v342
        %v413 = vpop.f32.mrb[0].mxu0
        %v414 = vadd.f32 %v346, %v413
        %v415 = vpop.f32.mrb[0].mxu0
        %416 = vdwg.mxu0
        %v417 = vtanh.pop %v414
        %v418 = vlaneseq
        %v419 = vshrl.u32 %v418, 7
        %v420 = vsub.s32 2, %v419
        %v421 = vrot.slane %v263, %v420
        %v422 = vmul.f32 %v417, %v421
        %v423 = vsub.f32 %v422, %v414
        %v424 = vlaneseq
        %v425 = vshrl.u32 %v424, 7
        %v426 = vsub.s32 3, %v425
        %v427 = vrot.slane %v263, %v426
        %v428 = vmul.f32 %v427, %v423
        %v429 = vadd.f32 %v414, %v428
        %430 = vst [vmem:[%s241] sm:$0xff] %v429
        %p431 = scmp.lt.s32.totalorder %s19, 1
        %s432 = scalar_select %p431, %s19, 1
        %s433 = smul.addr %s432, 8
        %s434 = scalar_lea.vmem %s4, %s433
        // Predicated region
        $region49: #{agent_head_forward.1} parent=35 // pred_check
          %p435 = pneg %p126
        $region50: #{agent_head_forward.1} parent=35 // pred_check_branch
          %437 = sbr.rel (%p435) target = $region52
        $region51: #{agent_head_forward.1} parent=35 // pred_region
          _
        $region52: #{agent_head_forward.1} parent=35 // pred_fallthru
          _
      $region36: #{agent_head_forward.1} parent=5 // pred_fallthru
        _
      %p438 = scmp.le.s32.totalorder 2, %s14
      // Predicated region
      $region53: #{agent_head_forward.1} parent=5 // pred_check
        %p439 = pneg %p438
      $region54: #{agent_head_forward.1} parent=5 // pred_check_branch
        %441 = sbr.rel (%p439) target = $region56
      $region55: #{agent_head_forward.1} parent=5 // pred_region
        %s442 = ssub.s32 %s14, 2
        // Predicated region
        $region57: #{agent_head_forward.1} parent=55 // pred_check
          %p443 = pneg %p132
        $region58: #{agent_head_forward.1} parent=55 // pred_check_branch
          %445 = sbr.rel (%p443) target = $region60
        $region59: #{agent_head_forward.1} parent=55 // pred_region
          %p446 = scmp.lt.s32.totalorder %s20, 1
          %s447 = scalar_select %p446, %s20, 1
          %s448 = smul.addr %s447, 8
          %s449 = scalar_lea.vmem %s4, %s448
        $region60: #{agent_head_forward.1} parent=55 // pred_fallthru
          _
      $region56: #{agent_head_forward.1} parent=5 // pred_fallthru
        _
    $region6: #{agent_head_forward.1} parent=1 // loop_footer
      %s18 = sadd.s32 1, %s14
    $region7: #{agent_head_forward.1} parent=1 // loop_footer_branch
      %13 = sbr.rel target = $region3
    $region8: #{agent_head_forward.1} parent=1 // loop_exit
      _
    %450 = vsyncpa [#allocation3], 1
    %s451 = scalar_lea.sflag [#allocation3], 1
    %452 = vsyncpa %s451, 1
    %453 = vsyncpa [#allocation5], 1

</llo_original>
